<compile_context>
chip_gen: v5e
topology: v5e:2x2
jax: 0.10.0
libtpu: 0.0.40
codegen_flags: <defaults>
</compile_context>

<pallas_src>
import functools

import jax
import jax.numpy as jnp
from jax.experimental import pallas as pl
from jax.experimental.pallas import tpu as pltpu


def _round_up(v, m):
    return ((v + m - 1) // m) * m


def _tpu_plan():
    """Per-generation VMEM budget/limit, MXU row target, and 2-TC hint."""
    try:
        kind = jax.devices()[0].device_kind.lower()
    except Exception:
        kind = ""
    cap = None
    try:
        cap = int(pltpu.get_tpu_info().vmem_capacity_bytes)
    except Exception:
        cap = None
    if cap is None:
        cap = 128 * 2**20 if any(v in kind for v in ("v4", "v5", "v6")) else 64 * 2**20
    if cap >= 100 * 2**20:            # v4 / v5e / v6e: 128 MiB physical VMEM
        budget, limit = 88 * 2**20, 100 * 2**20
    else:                             # v7x: 64 MiB per TensorCore
        budget, limit = 32 * 2**20, 56 * 2**20
    row_target = 128 if "v5" in kind else 256   # v5e MXU is 4x 128x128
    two_core = "v7" in kind                     # 2 TensorCores per chip
    return budget, limit, row_target, two_core


def _plan_tiles(B, T, Cp, L, Op, elt, has_mask, max_windows_per_chunk=None):
    """Pick (tb, t_chunk, n_t_chunks, vmem_limit) for the grid."""
    budget, limit, row_target, two_core = _tpu_plan()
    even = (T % L == 0)
    window = (T // L) if even else T

    Bp8 = _round_up(B, 8)
    # Smallest sublane-aligned batch block that fills the MXU M dim (tb*L rows).
    tb = min(_round_up(-(-row_target // L), 8), Bp8)
    if two_core and Bp8 >= 16 and _round_up(B, tb) // tb < 2:
        # v7x: guarantee >= 2 batch blocks so both TensorCores get work.
        tb = max(8, (Bp8 // 2) // 8 * 8)

    if even:
        divs = [d for d in range(L, 0, -1) if L % d == 0]
        if max_windows_per_chunk is not None:
            divs = [d for d in divs if d <= max(1, max_windows_per_chunk)]
        chunk_opts = [d * window for d in divs]        # whole windows per chunk
    else:
        chunk_opts = [T]                               # ragged: single chunk

    def est(tb_, tc_):
        x_b = 2 * tc_ * tb_ * Cp * elt                        # double-buffered x
        m_b = (2 * tc_ * tb_ * 128 * elt                      # lane-padded mask
               + tc_ * tb_ * Cp * elt) if has_mask else 0     # masked-select temp
        w_b = 2 * Cp * Op * elt                               # weight block
        pooled_b = L * tb_ * Cp * elt                         # pooled scratch
        o_b = 2 * L * tb_ * Op * elt                          # output block
        mm_b = L * tb_ * Op * 4                               # f32 matmul temp
        return x_b + m_b + w_b + pooled_b + o_b + mm_b + (1 << 20)

    def search(cap_bytes):
        for tb_ in range(tb, 7, -8):                   # keep tb at the MXU floor
            for tc_ in chunk_opts:                     # prefer the largest chunk
                if est(tb_, tc_) <= cap_bytes:
                    return tb_, tc_
        return None

    found = search(budget) or search(limit - 4 * 2**20)
    if found is None:
        raise ValueError(
            "MaxPooler Pallas kernel: minimal tiling needs "
            f"{est(8, chunk_opts[-1])} bytes of VMEM (> limit {limit}); "
            "reduce seq_len / dest_len / feature sizes.")
    tb, t_chunk = found
    nt = (T // t_chunk) if even else 1
    return tb, t_chunk, nt, limit


def _pool_proj_body(x_ref, m_ref, w_ref, b_ref, o_ref, pooled_ref, *,
                    seq_len, dest_len, window, n_w, tb, ragged):
    """One (batch-block, T-chunk) grid step.

    x_ref:      (Tc, tb, Cp)  raw TBC-layout slab (no wrapper transpose)
    m_ref:      (Tc, tb, 1)   pad mask (nonzero = padded) or None
    w_ref:      (Cp, Op)      pre-transposed Linear weight
    b_ref:      (1, Op)       bias (f32)
    o_ref:      (L, tb, Op)   output block (written only on the last T chunk)
    pooled_ref: (L, tb, Cp)   VMEM scratch holding pooled rows across T chunks
    """
    k = pl.program_id(1)
    x = x_ref[...]
    if m_ref is not None:
        # torch: x[pad_mask] = 0.0  (zero-fill BEFORE the max)
        x = jnp.where(m_ref[...] != 0, jnp.zeros_like(x), x)

    if ragged:
        # Exact adaptive_max_pool1d windows for T % L != 0 (single T chunk;
        # per-window max accumulated straight into the scratch, no concat).
        for i in range(dest_len):
            s = (i * seq_len) // dest_len
            e = -((-(i + 1) * seq_len) // dest_len)           # ceil((i+1)*T/L)
            pooled_ref[i] = jnp.max(x[s:e], axis=0).astype(pooled_ref.dtype)
    else:
        # Even windows: this chunk holds n_w complete windows of size `window`.
        # Splitting the *leading* (untiled) dim keeps the (tb, Cp) tiling.
        c = x.shape[-1]
        pooled = jnp.max(x.reshape(n_w, window, tb, c), axis=1)   # (n_w, tb, Cp)
        row0 = pl.multiple_of(k * n_w, n_w)
        pooled_ref[pl.ds(row0, n_w)] = pooled.astype(pooled_ref.dtype)

    @pl.when(k == pl.num_programs(1) - 1)
    def _():
        # tb is a multiple of 8, so collapsing (L, tb) -> L*tb stays tile-aligned.
        p = pooled_ref[...].reshape(dest_len * tb, -1)            # (L*tb, Cp)
        out = jnp.dot(p, w_ref[...], preferred_element_type=jnp.float32)
        out = out + b_ref[...]
        o_ref[...] = out.reshape(dest_len, tb, -1).astype(o_ref.dtype)


def _kernel_nomask(x_ref, w_ref, b_ref, o_ref, pooled_ref, **kw):
    _pool_proj_body(x_ref, None, w_ref, b_ref, o_ref, pooled_ref, **kw)


def _kernel_masked(x_ref, m_ref, w_ref, b_ref, o_ref, pooled_ref, **kw):
    _pool_proj_body(x_ref, m_ref, w_ref, b_ref, o_ref, pooled_ref, **kw)


def max_pooler_forward(x, dest_len, weight, bias, pad_mask=None, tbc=True,
                       _max_windows_per_chunk=None):
    """Pallas TPU forward for MaxPooler.

    x: (T, B, C) if tbc else (B, T, C).  weight: (O, C) torch nn.Linear layout.
    bias: (O,).  pad_mask: optional (B, T) bool, True = padded position.
    Returns (dest_len, B, O) if tbc else (B, dest_len, O).
    """
    if not tbc:
        # Non-default path: run the TBC-native kernel after one transpose.
        x = jnp.transpose(x, (1, 0, 2))
    T, B, C = x.shape
    O = weight.shape[0]
    L = int(dest_len)
    dtype = x.dtype

    # Lane-align contraction (C) and output (O) dims; no-ops for C=768 / O=512.
    Cp = _round_up(C, 128)
    Op = _round_up(O, 128)
    if Cp != C:
        x = jnp.pad(x, ((0, 0), (0, 0), (0, Cp - C)))
        weight = jnp.pad(weight, ((0, 0), (0, Cp - C)))
    if Op != O:
        weight = jnp.pad(weight, ((0, Op - O), (0, 0)))
        bias = jnp.pad(bias, (0, Op - O))
    # One-time wrapper transpose -> (Cp, Op); kernel contracts with a plain dot.
    # Weight kept in x's dtype (mixed precision when x is bf16; f32 accumulate).
    wt = jnp.transpose(weight).astype(dtype)
    b2 = bias.astype(jnp.float32).reshape(1, Op)

    has_mask = pad_mask is not None
    elt = jnp.dtype(dtype).itemsize
    tb, t_chunk, nt, vmem_limit = _plan_tiles(
        B, T, Cp, L, Op, elt, has_mask, _max_windows_per_chunk)

    Bp = _round_up(B, tb)
    if Bp != B:
        x = jnp.pad(x, ((0, 0), (0, Bp - B), (0, 0)))
    nb = Bp // tb
    grid = (nb, nt)

    even = (T % L == 0)
    window = (T // L) if even else T
    n_w = (t_chunk // window) if even else L
    body_kwargs = dict(seq_len=T, dest_len=L, window=window, n_w=n_w,
                       tb=tb, ragged=not even)

    x_spec = pl.BlockSpec((t_chunk, tb, Cp), lambda b, k: (k, b, 0))
    w_spec = pl.BlockSpec((Cp, Op), lambda b, k: (0, 0))
    bias_spec = pl.BlockSpec((1, Op), lambda b, k: (0, 0))
    o_spec = pl.BlockSpec((L, tb, Op), lambda b, k: (0, b, 0))
    scratch = [pltpu.VMEM((L, tb, Cp), dtype)]
    cparams = pltpu.CompilerParams(
        dimension_semantics=("parallel", "arbitrary"),
        vmem_limit_bytes=int(vmem_limit))
    out_shape = jax.ShapeDtypeStruct((L, Bp, Op), dtype)

    if has_mask:
        # (T, B, 1) mask in x's dtype (smaller VMEM footprint than f32).
        m = jnp.transpose(pad_mask.astype(dtype))[:, :, None]
        if Bp != B:
            m = jnp.pad(m, ((0, 0), (0, Bp - B), (0, 0)))
        out_pad = pl.pallas_call(
            functools.partial(_kernel_masked, **body_kwargs),
            out_shape=out_shape,
            grid=grid,
            in_specs=[x_spec,
                      pl.BlockSpec((t_chunk, tb, 1), lambda b, k: (k, b, 0)),
                      w_spec, bias_spec],
            out_specs=o_spec,
            scratch_shapes=scratch,
            compiler_params=cparams,
        )(x, m, wt, b2)
    else:
        out_pad = pl.pallas_call(
            functools.partial(_kernel_nomask, **body_kwargs),
            out_shape=out_shape,
            grid=grid,
            in_specs=[x_spec, w_spec, bias_spec],
            out_specs=o_spec,
            scratch_shapes=scratch,
            compiler_params=cparams,
        )(x, wt, b2)

    out = out_pad[:, :B, :O]                 # (L, B, O): native TBC output
    return out if tbc else jnp.transpose(out, (1, 0, 2))


def _reference_forward(x, dest_len, weight, bias, pad_mask=None, tbc=True):
    """Plain-JAX reference mirroring the PyTorch module."""
    if tbc:
        x = jnp.transpose(x, (1, 0, 2))
    if pad_mask is not None:
        x = jnp.where(pad_mask[..., None], 0.0, x)
    B, T, C = x.shape
    L = int(dest_len)
    rows = []
    for i in range(L):
        s = (i * T) // L
        e = -((-(i + 1) * T) // L)
        rows.append(jnp.max(x[:, s:e, :], axis=1, keepdims=True))
    pooled = jnp.concatenate(rows, axis=1)          # (B, L, C)
    out = pooled @ weight.T + bias
    if tbc:
        out = jnp.transpose(out, (1, 0, 2))
    return out


if __name__ == "__main__":
    # Small shapes consistent with the module's forward (TBC layout input).
    T, B, C, O = 8, 2, 32, 64

    key = jax.random.PRNGKey(0)
    k_x, k_w, k_b, k_m = jax.random.split(key, 4)

    x_tbc = jax.random.normal(k_x, (T, B, C), dtype=jnp.float32)
    weight = jax.random.normal(k_w, (O, C), dtype=jnp.float32) * 0.05   # (out, in)
    bias = jax.random.normal(k_b, (O,), dtype=jnp.float32) * 0.05
    pad_mask = jax.random.bernoulli(k_m, 0.2, (B, T))                   # True = padded

    def check(out, ref, shape, name):
        assert out.shape == shape, (name, out.shape)
        err = float(jnp.max(jnp.abs(out - ref)))
        assert err < 1e-4, (name, err)

    # 1) even windows + pad_mask, tbc=True (default path, masked kernel).
    L1 = 4
    out1 = jax.block_until_ready(
        max_pooler_forward(x_tbc, L1, weight, bias, pad_mask=pad_mask, tbc=True))
    check(out1, _reference_forward(x_tbc, L1, weight, bias, pad_mask, True),
          (L1, B, O), "even+mask")

    # 2) ragged windows (T % L != 0), no mask, tbc=True (slow-path pooling).
    L2 = 3
    out2 = jax.block_until_ready(
        max_pooler_forward(x_tbc, L2, weight, bias, pad_mask=None, tbc=True))
    check(out2, _reference_forward(x_tbc, L2, weight, bias, None, True),
          (L2, B, O), "ragged")

    # 3) even windows, no mask, tbc=False (BTC input).
    x_btc = jnp.transpose(x_tbc, (1, 0, 2))
    out3 = jax.block_until_ready(
        max_pooler_forward(x_btc, L1, weight, bias, pad_mask=None, tbc=False))
    check(out3, _reference_forward(x_btc, L1, weight, bias, None, False),
          (B, L1, O), "tbc=False")

    # 4) force multiple T chunks to exercise the chunked-reduction grid axis.
    out4 = jax.block_until_ready(
        max_pooler_forward(x_tbc, L1, weight, bias, pad_mask=pad_mask, tbc=True,
                           _max_windows_per_chunk=2))
    check(out4, _reference_forward(x_tbc, L1, weight, bias, pad_mask, True),
          (L1, B, O), "chunked-T")

    print("KERNEL_OK")
</pallas_src>

<mosaic_0001>
module attributes {stable_mosaic.version = 11 : i64} {
  func.func @_kernel_masked(%arg0: i32, %arg1: i32, %arg2: memref<8x8x128xf32, #tpu.memory_space<vmem>>, %arg3: memref<8x8x1xf32, #tpu.memory_space<vmem>>, %arg4: memref<128x128xf32, #tpu.memory_space<vmem>>, %arg5: memref<1x128xf32, #tpu.memory_space<vmem>>, %arg6: memref<4x8x128xf32, #tpu.memory_space<vmem>>, %arg7: memref<4x8x128xf32, #tpu.memory_space<vmem>>) attributes {dimension_semantics = [#tpu.dimension_semantics<parallel>, #tpu.dimension_semantics<arbitrary>], iteration_bounds = array<i64: 1, 1>, scalar_prefetch = 0 : i64, scratch_operands = 1 : i64, tpu.core_type = #tpu.core_type<tc>, window_params = [{transform_indices = @transform_0, window_bounds = array<i64: 8, 8, 128>}, {transform_indices = @transform_1, window_bounds = array<i64: 8, 8, 1>}, {pipeline_mode = #tpu.pipeline_mode<synchronous>, transform_indices = @transform_2, window_bounds = array<i64: 128, 128>}, {pipeline_mode = #tpu.pipeline_mode<synchronous>, transform_indices = @transform_3, window_bounds = array<i64: 1, 128>}, {transform_indices = @transform_4, window_bounds = array<i64: 4, 8, 128>}]} {
    %c0 = arith.constant 0 : index
    %c0_0 = arith.constant 0 : index
    %c0_1 = arith.constant 0 : index
    %0 = vector.load %arg2[%c0, %c0_0, %c0_1] : memref<8x8x128xf32, #tpu.memory_space<vmem>>, vector<8x8x128xf32>
    %c0_2 = arith.constant 0 : index
    %c0_3 = arith.constant 0 : index
    %c0_4 = arith.constant 0 : index
    %1 = vector.load %arg3[%c0_2, %c0_3, %c0_4] : memref<8x8x1xf32, #tpu.memory_space<vmem>>, vector<8x8x1xf32>
    %cst = arith.constant 0.000000e+00 : f32
    %2 = vector.broadcast %cst : f32 to vector<8x8x1xf32>
    %3 = arith.cmpf one, %1, %2 : vector<8x8x1xf32>
    %cst_5 = arith.constant 0.000000e+00 : f32
    %4 = vector.broadcast %cst_5 : f32 to vector<8x8x128xf32>
    %5 = vector.shape_cast %3 : vector<8x8x1xi1> to vector<8x8x1xi1>
    %6 = vector.broadcast %5 : vector<8x8x1xi1> to vector<8x8x128xi1>
    %7 = arith.select %6, %4, %0 : vector<8x8x128xi1>, vector<8x8x128xf32>
    %8 = vector.shape_cast %7 : vector<8x8x128xf32> to vector<4x2x8x128xf32>
    %cst_6 = arith.constant dense<0xFF800000> : vector<4x8x128xf32>
    %9 = vector.multi_reduction <maximumf>, %8, %cst_6 [1] : vector<4x2x8x128xf32> to vector<4x8x128xf32>
    %c4_i32 = arith.constant 4 : i32
    %10 = arith.muli %arg1, %c4_i32 : i32
    %11 = tpu.assume_multiple %10, 4 : i32
    %12 = arith.index_cast %11 : i32 to index
    %c0_7 = arith.constant 0 : index
    %c0_8 = arith.constant 0 : index
    %13 = vector.load %arg7[%12, %c0_7, %c0_8] : memref<4x8x128xf32, #tpu.memory_space<vmem>>, vector<4x8x128xf32>
    tpu.vector_store %arg7[%12, %c0_7, %c0_8], %9 {strides = array<i32>} : memref<4x8x128xf32, #tpu.memory_space<vmem>>, vector<4x8x128xf32>,
    %c0_i32 = arith.constant 0 : i32
    %14 = arith.cmpi eq, %arg1, %c0_i32 : i32
    %15 = arith.extui %14 : i1 to i32
    %c0_i32_9 = arith.constant 0 : i32
    %16 = arith.cmpi ne, %15, %c0_i32_9 : i32
    scf.if %16 {
      %c0_10 = arith.constant 0 : index
      %c0_11 = arith.constant 0 : index
      %c0_12 = arith.constant 0 : index
      %17 = vector.load %arg7[%c0_10, %c0_11, %c0_12] : memref<4x8x128xf32, #tpu.memory_space<vmem>>, vector<4x8x128xf32>
      %18 = vector.shape_cast %17 : vector<4x8x128xf32> to vector<32x128xf32>
      %c0_13 = arith.constant 0 : index
      %c0_14 = arith.constant 0 : index
      %19 = vector.load %arg4[%c0_13, %c0_14] : memref<128x128xf32, #tpu.memory_space<vmem>>, vector<128x128xf32>
      %cst_15 = arith.constant dense<0.000000e+00> : vector<32x128xf32>
      %20 = tpu.matmul %18, %19, %cst_15 {dimension_numbers = #tpu.dot_dimension_numbers<[1], [0], [0], [1], [0, 0, 1, 1], [], []>} : vector<32x128xf32>, vector<128x128xf32>, vector<32x128xf32> -> vector<32x128xf32>
      %c0_16 = arith.constant 0 : index
      %c0_17 = arith.constant 0 : index
      %21 = vector.load %arg5[%c0_16, %c0_17] : memref<1x128xf32, #tpu.memory_space<vmem>>, vector<1x128xf32>
      %22 = vector.broadcast %21 : vector<1x128xf32> to vector<32x128xf32>
      %23 = arith.addf %20, %22 : vector<32x128xf32>
      %24 = vector.shape_cast %23 : vector<32x128xf32> to vector<4x8x128xf32>
      %c0_18 = arith.constant 0 : index
      %c0_19 = arith.constant 0 : index
      %c0_20 = arith.constant 0 : index
      %25 = vector.load %arg6[%c0_18, %c0_19, %c0_20] : memref<4x8x128xf32, #tpu.memory_space<vmem>>, vector<4x8x128xf32>
      tpu.vector_store %arg6[%c0_18, %c0_19, %c0_20], %24 {strides = array<i32>} : memref<4x8x128xf32, #tpu.memory_space<vmem>>, vector<4x8x128xf32>,
    } else {
    }
    return
  }
  func.func @transform_0(%arg0: i32, %arg1: i32) -> (i32, i32, i32) {
    %c0_i32 = arith.constant 0 : i32
    %c0_i32_0 = arith.constant 0 : i32
    return %arg1, %arg0, %c0_i32 : i32, i32, i32
  }
  func.func @transform_1(%arg0: i32, %arg1: i32) -> (i32, i32, i32) {
    %c0_i32 = arith.constant 0 : i32
    %c0_i32_0 = arith.constant 0 : i32
    return %arg1, %arg0, %c0_i32 : i32, i32, i32
  }
  func.func @transform_2(%arg0: i32, %arg1: i32) -> (i32, i32) {
    %c0_i32 = arith.constant 0 : i32
    %c0_i32_0 = arith.constant 0 : i32
    %c0_i32_1 = arith.constant 0 : i32
    return %c0_i32, %c0_i32_0 : i32, i32
  }
  func.func @transform_3(%arg0: i32, %arg1: i32) -> (i32, i32) {
    %c0_i32 = arith.constant 0 : i32
    %c0_i32_0 = arith.constant 0 : i32
    %c0_i32_1 = arith.constant 0 : i32
    return %c0_i32, %c0_i32_0 : i32, i32
  }
  func.func @transform_4(%arg0: i32, %arg1: i32) -> (i32, i32, i32) {
    %c0_i32 = arith.constant 0 : i32
    %c0_i32_0 = arith.constant 0 : i32
    %c0_i32_1 = arith.constant 0 : i32
    return %c0_i32, %arg0, %c0_i32_0 : i32, i32, i32
  }
}

</mosaic_0001>

<llo_original>
// kernel: tpu_custom_call.1
$region0: #{tpu_custom_call.1}
  #allocation0 [shape = 'u32[]', space=smem, size = 0x4, offset = 0x4, fixed_abs, tag = 'smem constant byte address 0x4 - core index']
  #allocation1 [shape = 'u32[72,128]{1,0:T(1,128)}', space=vmem, size = 0x9000, scoped, tag = 'internal scratch']
  #allocation2 [shape = 'f32[4,8,128]{2,1,0:T(8,128)}', space=vmem, size = 0x4000, scoped, tag = 'scratch operand']
  %s0 = inlined_call_operand.vmem [shape: f32[8,8,128], index: 0, kind: input, shape index: {}]
  %s1 = inlined_call_operand.vmem [shape: f32[8,8,1], index: 1, kind: input, shape index: {}]
  %s2 = inlined_call_operand.hbm [shape: f32[128,128], index: 2, kind: input, shape index: {}]
  %s3 = inlined_call_operand.vmem [shape: f32[1,128], index: 3, kind: input, shape index: {}]
  %s4 = inlined_call_operand.hbm [shape: f32[4,8,128], index: 4, kind: output, shape index: {}]
  %s5 = sld [smem:[#allocation0]]
  $region34: #{tpu_custom_call.1} parent=0
    _
  %s7 = ssub.s32 1, %s5
  %s8 = scalar_select 0, %s7, %s5
  $region1: #{tpu_custom_call.1} parent=0
    #allocation3 [shape = 'u8[65536]{0}', space=vmem, size = 0x10000, scoped, tag = 'input window, operand 2, single buffered']
    #allocation4 [shape = 's32[1]{0}', space=sflag, size = 0x4, scoped, tag = 'scoped memory for tpu_custom_call.1']
    #allocation5 [shape = 's32[1]{0}', space=sflag, size = 0x4, scoped, tag = 'scoped memory for tpu_custom_call.1']
    #allocation6 [shape = 'u8[16384]{0}', space=vmem, size = 0x4000, scoped, tag = 'output window, operand 0, single buffered']
    %9 = vsyncpa [#allocation4], 0
    %10 = vsyncpa [#allocation5], 0
    // Predicated region
    $region2: #{tpu_custom_call.1} parent=1 // pred_check
      _
    $region3: #{tpu_custom_call.1} parent=1 // pred_check_branch
      %12 = sbr.rel (0) target = $region5
    $region4: #{tpu_custom_call.1} parent=1 // pred_region
      _
    $region5: #{tpu_custom_call.1} parent=1 // pred_fallthru
      _
    // Predicated region
    $region6: #{tpu_custom_call.1} parent=1 // pred_check
      _
    $region7: #{tpu_custom_call.1} parent=1 // pred_check_branch
      %14 = sbr.rel (0) target = $region9
    $region8: #{tpu_custom_call.1} parent=1 // pred_region
      _
    $region9: #{tpu_custom_call.1} parent=1 // pred_fallthru
      _
    // Predicated region
    $region10: #{tpu_custom_call.1} parent=1 // pred_check
      _
    $region11: #{tpu_custom_call.1} parent=1 // pred_check_branch
      %16 = sbr.rel (0) target = $region13
    $region12: #{tpu_custom_call.1} parent=1 // pred_region
      %18 = vsyncadd [#allocation4], 0
      %s19 = sshll.u32 %s2, 4
      %s20 = int_to_ptr.hbm [resolvable:$true] %s19
      %s21 = sshll.u32 [#allocation3], 4
      %s22 = int_to_ptr.vmem [resolvable:$true] %s21
      %27 = dma.hbm_to_vmem [thread:$0]  %s20, 2048, %s22, [#allocation4], 128, 128, 8
    $region13: #{tpu_custom_call.1} parent=1 // pred_fallthru
      _
    // Predicated region
    $region14: #{tpu_custom_call.1} parent=1 // pred_check
      _
    $region15: #{tpu_custom_call.1} parent=1 // pred_check_branch
      %29 = sbr.rel (0) target = $region17
    $region16: #{tpu_custom_call.1} parent=1 // pred_region
      _
    $region17: #{tpu_custom_call.1} parent=1 // pred_fallthru
      _
    // Predicated region
    $region18: #{tpu_custom_call.1} parent=1 // pred_check
      _
    $region19: #{tpu_custom_call.1} parent=1 // pred_check_branch
      %31 = sbr.rel (0) target = $region21
    $region20: #{tpu_custom_call.1} parent=1 // pred_region
      %33 = dma.done [#allocation4], 2048
    $region21: #{tpu_custom_call.1} parent=1 // pred_fallthru
      _
    %v34 = vld [vmem:[%s0] sm:$0xff]
    %v35 = vld [vmem:[%s0 + $0x8] sm:$0xff]
    %v36 = vld [vmem:[%s0 + $0x10] sm:$0xff]
    %v37 = vld [vmem:[%s0 + $0x18] sm:$0xff]
    %v38 = vld [vmem:[%s0 + $0x20] sm:$0xff]
    %v39 = vld [vmem:[%s0 + $0x28] sm:$0xff]
    %v40 = vld [vmem:[%s0 + $0x30] sm:$0xff]
    %v41 = vld [vmem:[%s0 + $0x38] sm:$0xff]
    %v42 = vld [vmem:[%s1] sm:$0xff]
    %v43 = vld [vmem:[%s1 + $0x8] sm:$0xff]
    %v44 = vld [vmem:[%s1 + $0x10] sm:$0xff]
    %v45 = vld [vmem:[%s1 + $0x18] sm:$0xff]
    %v46 = vld [vmem:[%s1 + $0x20] sm:$0xff]
    %v47 = vld [vmem:[%s1 + $0x28] sm:$0xff]
    %v48 = vld [vmem:[%s1 + $0x30] sm:$0xff]
    %v49 = vld [vmem:[%s1 + $0x38] sm:$0xff]
    %vm50 = vcmp.ne.f32.partialorder %v42, 0.0
    %vm51 = vcmp.ne.f32.partialorder %v43, 0.0
    %vm52 = vcmp.ne.f32.partialorder %v44, 0.0
    %vm53 = vcmp.ne.f32.partialorder %v45, 0.0
    %vm54 = vcmp.ne.f32.partialorder %v46, 0.0
    %vm55 = vcmp.ne.f32.partialorder %v47, 0.0
    %vm56 = vcmp.ne.f32.partialorder %v48, 0.0
    %vm57 = vcmp.ne.f32.partialorder %v49, 0.0
    %v58 = vsel %vm50, 1, 0
    %v59 = vsel %vm51, 1, 0
    %v60 = vsel %vm52, 1, 0
    %v61 = vsel %vm53, 1, 0
    %v62 = vsel %vm54, 1, 0
    %v63 = vsel %vm55, 1, 0
    %v64 = vsel %vm56, 1, 0
    %v65 = vsel %vm57, 1, 0
    %66 = vset.pattern.permute.xlu0 0
    %67 = vperm.xlu0 %66, %v58
    %v68 = vpop.permute.xlu0 %67
    %69 = vset.pattern.permute.xlu0 0
    %70 = vperm.xlu0 %69, %v59
    %v71 = vpop.permute.xlu0 %70
    %72 = vset.pattern.permute.xlu0 0
    %73 = vperm.xlu0 %72, %v60
    %v74 = vpop.permute.xlu0 %73
    %75 = vset.pattern.permute.xlu0 0
    %76 = vperm.xlu0 %75, %v61
    %v77 = vpop.permute.xlu0 %76
    %78 = vset.pattern.permute.xlu0 0
    %79 = vperm.xlu0 %78, %v62
    %v80 = vpop.permute.xlu0 %79
    %81 = vset.pattern.permute.xlu0 0
    %82 = vperm.xlu0 %81, %v63
    %v83 = vpop.permute.xlu0 %82
    %84 = vset.pattern.permute.xlu0 0
    %85 = vperm.xlu0 %84, %v64
    %v86 = vpop.permute.xlu0 %85
    %87 = vset.pattern.permute.xlu0 0
    %88 = vperm.xlu0 %87, %v65
    %v89 = vpop.permute.xlu0 %88
    %vm90 = vcmp.eq.s32.totalorder %v68, 1
    %vm91 = vcmp.eq.s32.totalorder %v71, 1
    %vm92 = vcmp.eq.s32.totalorder %v74, 1
    %vm93 = vcmp.eq.s32.totalorder %v77, 1
    %vm94 = vcmp.eq.s32.totalorder %v80, 1
    %vm95 = vcmp.eq.s32.totalorder %v83, 1
    %vm96 = vcmp.eq.s32.totalorder %v86, 1
    %vm97 = vcmp.eq.s32.totalorder %v89, 1
    %v98 = vsel %vm90, 0.0, %v34
    %v99 = vsel %vm91, 0.0, %v35
    %v100 = vsel %vm92, 0.0, %v36
    %v101 = vsel %vm93, 0.0, %v37
    %v102 = vsel %vm94, 0.0, %v38
    %v103 = vsel %vm95, 0.0, %v39
    %v104 = vsel %vm96, 0.0, %v40
    %v105 = vsel %vm97, 0.0, %v41
    %v106 = vmax.f32 %v98, %v99
    %v107 = vmax.f32 %v100, %v101
    %v108 = vmax.f32 %v102, %v103
    %v109 = vmax.f32 %v104, %v105
    %s110 = smul.u32 0, 4
    %s111 = smul.u32 %s110, 8
    %s112 = scalar_lea.vmem [#allocation2], %s111
    %113 = vst [vmem:[%s112] sm:$0xff] %v106
    %114 = vst [vmem:[%s112 + $0x8] sm:$0xff] %v107
    %115 = vst [vmem:[%s112 + $0x10] sm:$0xff] %v108
    %116 = vst [vmem:[%s112 + $0x18] sm:$0xff] %v109
    %p117 = scmp.eq.s32.totalorder 0, 0
    // Predicated region
    $region22: #{tpu_custom_call.1} parent=1 // pred_check
      %p118 = pneg %p117
    $region23: #{tpu_custom_call.1} parent=1 // pred_check_branch
      %120 = sbr.rel (%p118) target = $region25
    $region24: #{tpu_custom_call.1} parent=1 // pred_region
      %v121 = vld [vmem:[#allocation2] sm:$0xff]
      %v122 = vld [vmem:[#allocation2 + $0x8] sm:$0xff]
      %v123 = vld [vmem:[#allocation2 + $0x10] sm:$0xff]
      %v124 = vld [vmem:[#allocation2 + $0x18] sm:$0xff]
      %v125 = vld [vmem:[#allocation3] sm:$0xff]
      %v126 = vld [vmem:[#allocation3 + $0x8] sm:$0xff]
      %v127 = vld [vmem:[#allocation3 + $0x10] sm:$0xff]
      %v128 = vld [vmem:[#allocation3 + $0x18] sm:$0xff]
      %v129 = vld [vmem:[#allocation3 + $0x20] sm:$0xff]
      %v130 = vld [vmem:[#allocation3 + $0x28] sm:$0xff]
      %v131 = vld [vmem:[#allocation3 + $0x30] sm:$0xff]
      %v132 = vld [vmem:[#allocation3 + $0x38] sm:$0xff]
      %v133 = vld [vmem:[#allocation3 + $0x40] sm:$0xff]
      %v134 = vld [vmem:[#allocation3 + $0x48] sm:$0xff]
      %v135 = vld [vmem:[#allocation3 + $0x50] sm:$0xff]
      %v136 = vld [vmem:[#allocation3 + $0x58] sm:$0xff]
      %v137 = vld [vmem:[#allocation3 + $0x60] sm:$0xff]
      %v138 = vld [vmem:[#allocation3 + $0x68] sm:$0xff]
      %v139 = vld [vmem:[#allocation3 + $0x70] sm:$0xff]
      %v140 = vld [vmem:[#allocation3 + $0x78] sm:$0xff]
      %v141 = vld [vmem:[%s3] sm:$0x1]
      %v143 = vperm.slane %v141, 0
      %145 = vmatpush.msra.mxu0 %v140
      %146 = vmatpush.msra.mxu0 %v139
      %147 = vmatpush.msra.mxu0 %v138
      %148 = vmatpush.msra.mxu0 %v137
      %149 = vmatpush.msra.mxu0 %v136
      %150 = vmatpush.msra.mxu0 %v135
      %151 = vmatpush.msra.mxu0 %v134
      %152 = vmatpush.msra.mxu0 %v133
      %153 = vmatpush.msra.mxu0 %v132
      %154 = vmatpush.msra.mxu0 %v131
      %155 = vmatpush.msra.mxu0 %v130
      %156 = vmatpush.msra.mxu0 %v129
      %157 = vmatpush.msra.mxu0 %v128
      %158 = vmatpush.msra.mxu0 %v127
      %159 = vmatpush.msra.mxu0 %v126
      %160 = vmatpush.msra.mxu0 %v125
      %161 = vmatmul.f32.gmra.mxu0 %v121
      %v162 = vpop.f32.mrf.mxu0
      %v163 = vadd.f32 %v143, %v162
      %164 = vmatmul.f32.gmra.mxu0 %v122
      %v165 = vpop.f32.mrf.mxu0
      %v166 = vadd.f32 %v143, %v165
      %167 = vmatmul.f32.gmra.mxu0 %v123
      %v168 = vpop.f32.mrf.mxu0
      %v169 = vadd.f32 %v143, %v168
      %170 = vmatmul.f32.gmra.mxu0 %v124
      %v171 = vpop.f32.mrf.mxu0
      %v172 = vadd.f32 %v143, %v171
      %173 = vdwg.mxu0
      %174 = vst [vmem:[#allocation6] sm:$0xff] %v163
      %175 = vst [vmem:[#allocation6 + $0x8] sm:$0xff] %v166
      %176 = vst [vmem:[#allocation6 + $0x10] sm:$0xff] %v169
      %177 = vst [vmem:[#allocation6 + $0x18] sm:$0xff] %v172
    $region25: #{tpu_custom_call.1} parent=1 // pred_fallthru
      _
    // Predicated region
    $region26: #{tpu_custom_call.1} parent=1 // pred_check
      _
    $region27: #{tpu_custom_call.1} parent=1 // pred_check_branch
      %179 = sbr.rel (0) target = $region29
    $region28: #{tpu_custom_call.1} parent=1 // pred_region
      %181 = vsyncadd [#allocation5], 0
      %s182 = sshll.u32 [#allocation6], 4
      %s183 = int_to_ptr.vmem [resolvable:$true] %s182
      %s184 = sshll.u32 %s4, 4
      %s185 = int_to_ptr.hbm [resolvable:$true] %s184
      %190 = dma.vmem_to_hbm [thread:$0]  %s183, 512, %s185, [#allocation5], 128, 128, 8
    $region29: #{tpu_custom_call.1} parent=1 // pred_fallthru
      _
    // Predicated region
    $region30: #{tpu_custom_call.1} parent=1 // pred_check
      _
    $region31: #{tpu_custom_call.1} parent=1 // pred_check_branch
      %192 = sbr.rel (0) target = $region33
    $region32: #{tpu_custom_call.1} parent=1 // pred_region
      %194 = dma.done [#allocation5], 512
    $region33: #{tpu_custom_call.1} parent=1 // pred_fallthru
      _
    %195 = vsyncpa [#allocation4], 1
    %196 = vsyncpa [#allocation5], 1

</llo_original>
